<compile_context>
chip_gen: v6e
topology: v6e:2x2x1
jax: 0.10.0
libtpu: 0.0.40
codegen_flags: <defaults>
</compile_context>

<pallas_src>
import jax
import jax.numpy as jnp
from jax.experimental import pallas as pl
from jax.experimental.pallas import tpu as pltpu


def _swish_kernel(x_ref, o_ref):
    x = x_ref[...]
    xf = x.astype(jnp.float32)
    # swish(x) = x * sigmoid(x).  Exact sigmoid: exp lives on the EUP, the
    # divide on the VALU — both are fully hidden behind the HBM DMA.
    o_ref[...] = (xf * jax.nn.sigmoid(xf)).astype(o_ref.dtype)


def swish(x, *, target_tile_bytes=2 * 1024 * 1024):
    """Elementwise swish for arbitrary-shaped x via a Pallas TPU kernel."""
    orig_shape = x.shape
    dtype = x.dtype
    n = x.size
    if n == 0:
        return x

    itemsize = jnp.dtype(dtype).itemsize
    # Native sublane packing: 8 rows for 32-bit, 16 for 16-bit, 32 for 8-bit.
    sub = {4: 8, 2: 16, 1: 32}.get(itemsize, 8)

    # Pick the widest lane-dense slab width that allows a zero-copy reshape.
    width = None
    for w in (1024, 512, 256, 128):
        if n % w == 0:
            width = w
            break
    needs_pad = width is None
    if needs_pad:
        width = 1024  # awkward size: pad once to a wide slab anyway

    rows = pl.cdiv(n, width)

    flat = x.reshape(-1)
    if needs_pad:
        flat = jnp.pad(flat, (0, rows * width - n))
    slab = flat.reshape(rows, width)

    # ~target_tile_bytes per block, rows a multiple of the sublane packing.
    tr_target = max(sub, (target_tile_bytes // (width * itemsize)) // sub * sub)
    if rows <= tr_target:
        tr = rows          # full extent: always a legal block shape
        grid_r = 1
    else:
        tr = tr_target     # multiple of `sub`; last partial block masked by Pallas
        grid_r = pl.cdiv(rows, tr)

    out = pl.pallas_call(
        _swish_kernel,
        out_shape=jax.ShapeDtypeStruct((rows, width), dtype),
        grid_spec=pltpu.PrefetchScalarGridSpec(
            num_scalar_prefetch=0,
            grid=(grid_r,),
            in_specs=[pl.BlockSpec((tr, width), lambda i: (i, 0))],
            out_specs=pl.BlockSpec((tr, width), lambda i: (i, 0)),
        ),
        compiler_params=pltpu.CompilerParams(
            dimension_semantics=("parallel",),
        ),
    )(slab)

    if needs_pad:
        return out.reshape(-1)[:n].reshape(orig_shape)
    return out.reshape(orig_shape)


def _ref(x):
    return x * jax.nn.sigmoid(x)


if __name__ == "__main__":
    key = jax.random.PRNGKey(0)

    # NCHW-style input (batch=2, channels=4, 16x16 spatial): zero-copy path.
    x = jax.random.normal(key, (2, 4, 16, 16), dtype=jnp.float32)
    y = swish(x)
    jax.block_until_ready(y)
    assert y.shape == x.shape and y.dtype == x.dtype
    assert jnp.allclose(y, _ref(x), atol=1e-6, rtol=1e-6)

    # Multi-block grid with a partial final block (zero-copy path).
    x2 = jax.random.normal(jax.random.PRNGKey(1), (2, 10, 32, 32), dtype=jnp.float32)
    y2 = swish(x2, target_tile_bytes=32 * 1024)
    jax.block_until_ready(y2)
    assert jnp.allclose(y2, _ref(x2), atol=1e-6, rtol=1e-6)

    # Awkward size exercising the single-pad fallback path.
    x3 = jax.random.normal(jax.random.PRNGKey(2), (3, 5, 7), dtype=jnp.float32)
    y3 = swish(x3)
    jax.block_until_ready(y3)
    assert y3.shape == x3.shape and jnp.allclose(y3, _ref(x3), atol=1e-6, rtol=1e-6)

    # bf16 path (16-sublane row tiling, compute in f32, cast back).
    x4 = jax.random.normal(jax.random.PRNGKey(3), (2, 4, 16, 16), dtype=jnp.bfloat16)
    y4 = swish(x4)
    jax.block_until_ready(y4)
    assert y4.dtype == jnp.bfloat16
    assert jnp.allclose(y4.astype(jnp.float32),
                        _ref(x4.astype(jnp.float32)), atol=1e-2, rtol=1e-2)

    print("KERNEL_OK")
</pallas_src>

<mosaic_0001>
module attributes {stable_mosaic.version = 11 : i64} {
  func.func @_swish_kernel(%arg0: i32, %arg1: memref<2x1024xf32, #tpu.memory_space<vmem>>, %arg2: memref<2x1024xf32, #tpu.memory_space<vmem>>) attributes {dimension_semantics = [#tpu.dimension_semantics<parallel>], iteration_bounds = array<i64: 1>, scalar_prefetch = 0 : i64, scratch_operands = 0 : i64, tpu.core_type = #tpu.core_type<tc>, window_params = [{transform_indices = @transform_0, window_bounds = array<i64: 2, 1024>}, {transform_indices = @transform_1, window_bounds = array<i64: 2, 1024>}]} {
    %c0 = arith.constant 0 : index
    %c0_0 = arith.constant 0 : index
    %0 = vector.load %arg1[%c0, %c0_0] : memref<2x1024xf32, #tpu.memory_space<vmem>>, vector<2x1024xf32>
    %1 = arith.negf %0 : vector<2x1024xf32>
    %2 = math.exp %1 : vector<2x1024xf32>
    %cst = arith.constant 1.000000e+00 : f32
    %3 = vector.broadcast %cst : f32 to vector<2x1024xf32>
    %4 = arith.addf %3, %2 : vector<2x1024xf32>
    %5 = arith.divf %3, %4 : vector<2x1024xf32>
    %6 = arith.mulf %0, %5 : vector<2x1024xf32>
    %c0_1 = arith.constant 0 : index
    %c0_2 = arith.constant 0 : index
    %7 = vector.load %arg2[%c0_1, %c0_2] : memref<2x1024xf32, #tpu.memory_space<vmem>>, vector<2x1024xf32>
    tpu.vector_store %arg2[%c0_1, %c0_2], %6 {strides = array<i32>} : memref<2x1024xf32, #tpu.memory_space<vmem>>, vector<2x1024xf32>,
    return
  }
  func.func @transform_0(%arg0: i32) -> (i32, i32) {
    %c0_i32 = arith.constant 0 : i32
    %c0_i32_0 = arith.constant 0 : i32
    return %arg0, %c0_i32 : i32, i32
  }
  func.func @transform_1(%arg0: i32) -> (i32, i32) {
    %c0_i32 = arith.constant 0 : i32
    %c0_i32_0 = arith.constant 0 : i32
    return %arg0, %c0_i32 : i32, i32
  }
}

</mosaic_0001>

<llo_original>
// kernel: tpu_custom_call.1
$region0: #{tpu_custom_call.1}
  #allocation0 [shape = 'u32[]', space=smem, size = 0x4, offset = 0x4, fixed_abs, tag = 'smem constant byte address 0x4 - core index']
  #allocation1 [shape = 'u32[144,128]{1,0:T(1,128)}', space=vmem, size = 0x12000, scoped, tag = 'internal scratch']
  %s0 = inlined_call_operand.hbm [shape: f32[2,1024], index: 0, kind: input, shape index: {}]
  %s1 = inlined_call_operand.hbm [shape: f32[2,1024], index: 1, kind: output, shape index: {}]
  %s2 = sld [smem:[#allocation0]]
  $region18: #{tpu_custom_call.1} parent=0
    _
  %s4 = ssub.s32 1, %s2
  %s5 = scalar_select 0, %s4, %s2
  $region1: #{tpu_custom_call.1} parent=0
    #allocation2 [shape = 'u8[8192]{0}', space=vmem, size = 0x2000, scoped, tag = 'input window, operand 0, single buffered']
    #allocation3 [shape = 's32[1]{0}', space=sflag, size = 0x4, scoped, tag = 'scoped memory for tpu_custom_call.1']
    #allocation4 [shape = 's32[1]{0}', space=sflag, size = 0x4, scoped, tag = 'scoped memory for tpu_custom_call.1']
    #allocation5 [shape = 'u8[8192]{0}', space=vmem, size = 0x2000, scoped, tag = 'output window, operand 0, single buffered']
    %6 = vsyncpa [#allocation3], 0
    %7 = vsyncpa [#allocation4], 0
    // Predicated region
    $region2: #{tpu_custom_call.1} parent=1 // pred_check
      _
    $region3: #{tpu_custom_call.1} parent=1 // pred_check_branch
      %9 = sbr.rel (0) target = $region5
    $region4: #{tpu_custom_call.1} parent=1 // pred_region
      %s11 = ssub.s32 256, 256
      %12 = vsyncadd [#allocation3], %s11
      %s14 = sshll.u32 [#allocation2], 4
      %s15 = int_to_ptr.vmem [resolvable:$true] %s14
      %17 = dma.hbm_to_vmem [thread:$0]  %s0, 256, %s15, [#allocation3]
    $region5: #{tpu_custom_call.1} parent=1 // pred_fallthru
      _
    // Predicated region
    $region6: #{tpu_custom_call.1} parent=1 // pred_check
      _
    $region7: #{tpu_custom_call.1} parent=1 // pred_check_branch
      %19 = sbr.rel (0) target = $region9
    $region8: #{tpu_custom_call.1} parent=1 // pred_region
      %20 = dma.done [#allocation3], 256
    $region9: #{tpu_custom_call.1} parent=1 // pred_fallthru
      _
    %v21 = vld [vmem:[#allocation2] sm:$0xff]
    %v22 = vld [vmem:[#allocation2 + $0x8] sm:$0xff]
    %v23 = vxor.u32 %v21, 2147483648
    %v24 = vxor.u32 %v22, 2147483648
    %v25 = vmul.f32 %v23, 1.442695
    %v26 = vpow.pop %v25
    %v27 = vmul.f32 %v24, 1.442695
    %v28 = vpow.pop %v27
    %v29 = vadd.f32 %v26, 1.0
    %v30 = vadd.f32 %v28, 1.0
    %v31 = vrcp.pop %v29
    %v32 = vmul.f32 1.0, %v31
    %v33 = vrcp.pop %v30
    %v34 = vmul.f32 1.0, %v33
    %v35 = vmul.f32 %v21, %v32
    %v36 = vmul.f32 %v22, %v34
    %37 = vst [vmem:[#allocation5] sm:$0xff] %v35
    %38 = vst [vmem:[#allocation5 + $0x8] sm:$0xff] %v36
    // Predicated region
    $region10: #{tpu_custom_call.1} parent=1 // pred_check
      _
    $region11: #{tpu_custom_call.1} parent=1 // pred_check_branch
      %40 = sbr.rel (0) target = $region13
    $region12: #{tpu_custom_call.1} parent=1 // pred_region
      %s42 = ssub.s32 256, 256
      %43 = vsyncadd [#allocation4], %s42
      %s45 = sshll.u32 [#allocation5], 4
      %s46 = int_to_ptr.vmem [resolvable:$true] %s45
      %48 = dma.vmem_to_hbm [thread:$0]  %s46, 256, %s1, [#allocation4]
    $region13: #{tpu_custom_call.1} parent=1 // pred_fallthru
      _
    // Predicated region
    $region14: #{tpu_custom_call.1} parent=1 // pred_check
      _
    $region15: #{tpu_custom_call.1} parent=1 // pred_check_branch
      %50 = sbr.rel (0) target = $region17
    $region16: #{tpu_custom_call.1} parent=1 // pred_region
      %51 = dma.done [#allocation4], 256
    $region17: #{tpu_custom_call.1} parent=1 // pred_fallthru
      _
    %52 = vsyncpa [#allocation3], 1
    %53 = vsyncpa [#allocation4], 1

</llo_original>
